<compile_context>
chip_gen: v5e
topology: v5e:2x2
jax: 0.10.0
libtpu: 0.0.40
codegen_flags: <defaults>
</compile_context>

<pallas_src>
import jax
import jax.numpy as jnp
from jax.experimental import pallas as pl
from jax.experimental.pallas import tpu as pltpu


def _round_up(x, m):
    return ((x + m - 1) // m) * m


def _cdiv(a, b):
    return (a + b - 1) // b


def _vmem_capacity_bytes():
    try:
        info = pltpu.get_tpu_info()
        cap = getattr(info, "vmem_capacity_bytes", None)
        if cap:
            return int(cap)
    except Exception:
        pass
    return 64 * 1024 * 1024  # conservative (v7x per-TC VMEM)


# ----------------------------------------------------------------------------
# Pallas kernel 1: camera transform of mesh vertices (row-vector convention)
#   verts_view[n] = verts @ R[n] + T[n]
# Lane-dense layout: vertices on the 128-lane axis, one grid step per camera.
# ----------------------------------------------------------------------------
def _transform_verts_kernel(v_ref, r_ref, t_ref, o_ref):
    v = v_ref[...]          # (3, Vp) f32 (resident, fetched once)
    R = r_ref[0]            # (3, 3)
    t = t_ref[0]            # (3, 1)
    rows = []
    for j in range(3):      # out[j, :] = sum_k v[k, :] * R[k, j] + T[j]
        rows.append(v[0:1, :] * R[0:1, j:j + 1]
                    + v[1:2, :] * R[1:2, j:j + 1]
                    + v[2:3, :] * R[2:3, j:j + 1]
                    + t[j:j + 1, :])
    o_ref[0] = jnp.concatenate(rows, axis=0)


def transform_verts(verts, R, T):
    """verts (V,3) f32, R (N,3,3) f32, T (N,3) f32 -> (N,V,3) f32."""
    V = verts.shape[0]
    N = R.shape[0]
    Vp = _round_up(V, 128)
    vT = jnp.pad(jnp.transpose(verts.astype(jnp.float32), (1, 0)),
                 ((0, 0), (0, Vp - V)))                     # (3, Vp) lane-dense
    T3 = T.reshape(N, 3, 1).astype(jnp.float32)
    out = pl.pallas_call(
        _transform_verts_kernel,
        out_shape=jax.ShapeDtypeStruct((N, 3, Vp), jnp.float32),
        grid=(N,),
        in_specs=[
            pl.BlockSpec((3, Vp), lambda i: (0, 0)),        # constant -> fetched once
            pl.BlockSpec((1, 3, 3), lambda i: (i, 0, 0)),
            pl.BlockSpec((1, 3, 1), lambda i: (i, 0, 0)),
        ],
        out_specs=pl.BlockSpec((1, 3, Vp), lambda i: (i, 0, 0)),
        compiler_params=pltpu.CompilerParams(
            dimension_semantics=("parallel",)),
    )(vT, R.astype(jnp.float32), T3)
    return jnp.transpose(out[:, :, :V], (0, 2, 1))          # (N, V, 3)


# ----------------------------------------------------------------------------
# Pallas kernel 2: per-pixel weighted gather of face memory (hot path)
#   out[n, :, p] = sum_j bary[n, j, p] * face_memory[pix_to_face[n, p], j, :]
#   (zeros for background pixels, pix_to_face == -1)
# ----------------------------------------------------------------------------
def _make_resident_kernel(c_feat, tile_nf, num_chunks):
    """Face memory resident in VMEM (fetched once); in-kernel chunk loop with
    per-tile chunk-range skipping; single-chunk case fully specialized."""
    def kernel(lo_ref, hi_ref, pix_ref, bary_ref, fmem_ref, o_ref):
        idx = pix_ref[0]                                     # (1, TP) int32
        tp = idx.shape[1]
        iota = jax.lax.broadcasted_iota(jnp.int32, (tile_nf, tp), 0)

        if num_chunks == 1:
            # One matmul straight to the output tile: no accumulator, no loop.
            onehot_t = (iota == idx).astype(jnp.bfloat16)    # (NFc, TP)
            acc = jnp.dot(fmem_ref[0], onehot_t,
                          preferred_element_type=jnp.float32)
        else:
            n = pl.program_id(0)
            t = pl.program_id(1)
            lo = lo_ref[n, t]    # first face chunk touched by this pixel tile
            hi = hi_ref[n, t]    # one past the last chunk touched

            def body(c, acc):
                rel = idx - c * tile_nf                      # (1, TP) row sub
                onehot_t = (iota == rel).astype(jnp.bfloat16)
                return acc + jnp.dot(fmem_ref[c], onehot_t,
                                     preferred_element_type=jnp.float32)

            acc = jax.lax.fori_loop(
                lo, hi, body, jnp.zeros((3 * c_feat, tp), jnp.float32))

        bary = bary_ref[0]                                   # (3, TP) f32
        out = (bary[0:1, :] * acc[0:c_feat, :]
               + bary[1:2, :] * acc[c_feat:2 * c_feat, :]
               + bary[2:3, :] * acc[2 * c_feat:3 * c_feat, :])
        o_ref[0] = out.astype(o_ref.dtype)
    return kernel


def _make_stream_kernel(c_feat, tile_nf):
    """Fallback when the face memory does not fit VMEM: stream NF chunks over a
    last 'arbitrary' grid axis; compute is skipped for non-overlapping chunks."""
    def kernel(lo_ref, hi_ref, pix_ref, bary_ref, fmem_ref, o_ref, acc_ref):
        n = pl.program_id(0)
        t = pl.program_id(1)
        k = pl.program_id(2)
        tp = pix_ref.shape[2]

        @pl.when(k == 0)
        def _():
            acc_ref[...] = jnp.zeros_like(acc_ref)

        lo = lo_ref[n, t]
        hi = hi_ref[n, t]

        @pl.when(jnp.logical_and(k >= lo, k < hi))
        def _():
            idx = pix_ref[0]
            rel = idx - k * tile_nf
            iota = jax.lax.broadcasted_iota(jnp.int32, (tile_nf, tp), 0)
            onehot_t = (iota == rel).astype(jnp.bfloat16)
            acc_ref[...] += jnp.dot(fmem_ref[0], onehot_t,
                                    preferred_element_type=jnp.float32)

        @pl.when(k == pl.num_programs(2) - 1)
        def _():
            bary = bary_ref[0]
            acc = acc_ref[...]
            out = (bary[0:1, :] * acc[0:c_feat, :]
                   + bary[1:2, :] * acc[c_feat:2 * c_feat, :]
                   + bary[2:3, :] * acc[2 * c_feat:3 * c_feat, :])
            o_ref[0] = out.astype(o_ref.dtype)
    return kernel


def interpolate_face_attributes_pallas(pix_to_face, bary_coords, face_memory,
                                       tile_p=512, tile_nf=512,
                                       force_stream=False):
    """pix_to_face (N,P) int32 (per-camera-local face idx, -1 = background),
    bary (N,P,3) f32, face_memory (NF,3,C) f32  ->  (N,C,P) f32 (lane-dense)."""
    N, P = pix_to_face.shape
    NF, _, C = face_memory.shape

    # ---- tile sizes ------------------------------------------------------
    tile_p = max(128, min(tile_p, _round_up(P, 128)))
    tile_p = (tile_p // 128) * 128
    # v7x has 2 TensorCores sharding the "parallel" axes; keep enough steps.
    while tile_p > 256 and N * _cdiv(P, tile_p) < 8:
        tile_p -= 128
    Pp = _round_up(P, tile_p)
    num_tiles = Pp // tile_p

    tile_nf = max(128, min(tile_nf, _round_up(NF, 128)))
    tile_nf = (tile_nf // 128) * 128
    NFp = _round_up(NF, tile_nf)
    num_chunks = NFp // tile_nf

    # ---- lane-dense input layouts ---------------------------------------
    pix_flat = jnp.pad(pix_to_face.astype(jnp.int32),
                       ((0, 0), (0, Pp - P)), constant_values=-1)   # (N, Pp)
    pix = pix_flat.reshape(N, 1, Pp)
    bary = jnp.transpose(bary_coords.astype(jnp.float32), (0, 2, 1))  # (N,3,P)
    bary = jnp.pad(bary, ((0, 0), (0, 0), (0, Pp - P)))

    # Face memory packed as (num_chunks, 3C, tile_nf) bf16.  Padded faces are
    # zero and background pixels (-1) never match the one-hot, so both
    # contribute exactly zero.
    fmem = face_memory.astype(jnp.float32).reshape(NF, 3 * C)
    fmem = jnp.pad(fmem, ((0, NFp - NF), (0, 0)))
    fmem = fmem.reshape(num_chunks, tile_nf, 3 * C)
    fmem = jnp.transpose(fmem, (0, 2, 1)).astype(jnp.bfloat16)

    # ---- per-(camera, pixel-tile) face-id chunk range (scalar prefetch) --
    pt = pix_flat.reshape(N, num_tiles, tile_p)
    lo_id = jnp.where(pt >= 0, pt, NFp).min(axis=-1)
    hi_id = jnp.where(pt >= 0, pt, -1).max(axis=-1)
    lo_chunk = jnp.minimum(lo_id // tile_nf, num_chunks).astype(jnp.int32)
    hi_chunk = jnp.where(hi_id < 0, lo_chunk,
                         hi_id // tile_nf + 1).astype(jnp.int32)

    # ---- residency decision (fetch face memory once vs stream chunks) ----
    vmem_cap = _vmem_capacity_bytes()
    fmem_bytes = num_chunks * 3 * C * tile_nf * 2            # bf16
    working = (2 * C * tile_p * 4            # double-buffered output tile
               + 3 * C * tile_p * 4          # f32 accumulator
               + tile_nf * tile_p * 2        # one-hot temporary
               + 8 * tile_p * 4)             # pix / bary tiles
    need = 2 * fmem_bytes + working + (4 << 20)
    resident = (not force_stream) and (need <= int(vmem_cap * 0.85))

    if resident:
        vmem_limit = max(32 << 20, min(int(vmem_cap * 0.9), need + (4 << 20)))
        kernel = _make_resident_kernel(C, tile_nf, num_chunks)
        grid_spec = pltpu.PrefetchScalarGridSpec(
            num_scalar_prefetch=2,
            grid=(N, num_tiles),
            in_specs=[
                pl.BlockSpec((1, 1, tile_p), lambda n, t, lo, hi: (n, 0, t)),
                pl.BlockSpec((1, 3, tile_p), lambda n, t, lo, hi: (n, 0, t)),
                # Constant index_map: the packed face memory is DMA'd once and
                # stays resident in VMEM for the whole grid (no per-tile restream).
                pl.BlockSpec((num_chunks, 3 * C, tile_nf),
                             lambda n, t, lo, hi: (0, 0, 0)),
            ],
            out_specs=pl.BlockSpec((1, C, tile_p),
                                   lambda n, t, lo, hi: (n, 0, t)),
        )
        dims = ("parallel", "parallel")
    else:
        vmem_limit = 32 << 20
        kernel = _make_stream_kernel(C, tile_nf)
        grid_spec = pltpu.PrefetchScalarGridSpec(
            num_scalar_prefetch=2,
            grid=(N, num_tiles, num_chunks),
            in_specs=[
                pl.BlockSpec((1, 1, tile_p),
                             lambda n, t, k, lo, hi: (n, 0, t)),
                pl.BlockSpec((1, 3, tile_p),
                             lambda n, t, k, lo, hi: (n, 0, t)),
                pl.BlockSpec((1, 3 * C, tile_nf),
                             lambda n, t, k, lo, hi: (k, 0, 0)),
            ],
            out_specs=pl.BlockSpec((1, C, tile_p),
                                   lambda n, t, k, lo, hi: (n, 0, t)),
            scratch_shapes=[pltpu.VMEM((3 * C, tile_p), jnp.float32)],
        )
        dims = ("parallel", "parallel", "arbitrary")

    out = pl.pallas_call(
        kernel,
        out_shape=jax.ShapeDtypeStruct((N, C, Pp), jnp.float32),
        grid_spec=grid_spec,
        compiler_params=pltpu.CompilerParams(
            dimension_semantics=dims, vmem_limit_bytes=int(vmem_limit)),
    )(lo_chunk, hi_chunk, pix, bary, fmem)
    return out[:, :, :P]


# ----------------------------------------------------------------------------
# Plain-JAX glue (camera math + simplified rasterizer stand-in)
# ----------------------------------------------------------------------------
def _normalize(x, axis=-1, eps=1e-8):
    return x / (jnp.linalg.norm(x, axis=axis, keepdims=True) + eps)


def look_at_rotation(campos, at=None, up=None):
    if at is None:
        at = jnp.zeros((1, 3), jnp.float32)
    if up is None:
        up = jnp.array([[0.0, 1.0, 0.0]], jnp.float32)
    z = _normalize(at - campos)
    x = _normalize(jnp.cross(jnp.broadcast_to(up, z.shape), z))
    y = _normalize(jnp.cross(z, x))
    return jnp.stack([x, y, z], axis=-1)          # (N,3,3), columns are axes


def rotation_theta(theta):
    c, s = jnp.cos(theta), jnp.sin(theta)
    z = jnp.zeros_like(c)
    o = jnp.ones_like(c)
    return jnp.stack([c, -s, z, s, c, z, z, z, o], axis=-1).reshape(-1, 3, 3)


def campos_to_R_T(campos, theta):
    R = look_at_rotation(campos) @ rotation_theta(theta)          # (N,3,3)
    T = -jnp.einsum('nji,nj->ni', R, campos)                      # (N,3)
    return R, T


def simple_rasterizer(verts_view, faces, H, W, focal=3.0):
    """Simplified stand-in for the external VoGE / pytorch3d rasterizer.
    Returns (pix_to_face (N,H*W) int32 per-camera-local face index or -1,
             bary_coords (N,H*W,3) f32)."""
    # TODO(synk): VoGE's Gaussian-ellipsoid soft rasterization (GaussianMesh +
    # per-pixel K-component Gaussian weights) is an external dependency with no
    # clean Pallas equivalent; a simplified projective z-buffer triangle
    # rasterizer in plain JAX is used instead.  Barycentrics are recomputed only
    # for the argmin face to avoid an (N,P,F,3) HBM intermediate.
    z = verts_view[..., 2]
    zsafe = jnp.where(jnp.abs(z) < 1e-6, 1e-6, z)
    xy = focal * verts_view[..., :2] / zsafe[..., None]          # (N,V,2)

    tri = xy[:, faces, :]                                        # (N,F,3,2)
    tz = z[:, faces]                                             # (N,F,3)

    ys = (jnp.arange(H, dtype=jnp.float32) + 0.5) / H * 2.0 - 1.0
    xs = (jnp.arange(W, dtype=jnp.float32) + 0.5) / W * 2.0 - 1.0
    px, py = jnp.meshgrid(xs, ys)
    pix = jnp.stack([px.reshape(-1), py.reshape(-1)], -1)        # (P,2)

    def edge(a, b, c):
        return ((b[..., 0] - a[..., 0]) * (c[..., 1] - a[..., 1])
                - (b[..., 1] - a[..., 1]) * (c[..., 0] - a[..., 0]))

    a0 = tri[:, None, :, 0, :]     # (N,1,F,2)
    a1 = tri[:, None, :, 1, :]
    a2 = tri[:, None, :, 2, :]
    p = pix[None, :, None, :]      # (1,P,1,2)

    area = edge(a0, a1, a2)                                      # (N,1,F)
    denom = jnp.where(jnp.abs(area) < 1e-9, 1.0, area)
    b0 = edge(a1, a2, p) / denom                                 # (N,P,F)
    b1 = edge(a2, a0, p) / denom
    b2 = edge(a0, a1, p) / denom
    zin = (b0 * tz[:, None, :, 0] + b1 * tz[:, None, :, 1]
           + b2 * tz[:, None, :, 2])
    inside = ((b0 >= 0) & (b1 >= 0) & (b2 >= 0)
              & (jnp.abs(area) > 1e-9) & (zin > 1e-3))
    depth = jnp.where(inside, zin, jnp.inf)
    best = jnp.argmin(depth, axis=-1).astype(jnp.int32)          # (N,P) local idx
    hit = jnp.isfinite(jnp.min(depth, axis=-1))
    pix_to_face = jnp.where(hit, best, -1).astype(jnp.int32)     # per-camera-local

    # Recompute barycentrics only for the selected face.
    tri_best = jnp.take_along_axis(
        tri, best[:, :, None, None], axis=1)                     # (N,P,3,2)
    A0 = tri_best[:, :, 0, :]
    A1 = tri_best[:, :, 1, :]
    A2 = tri_best[:, :, 2, :]
    pp = pix[None, :, :]                                         # (1,P,2)
    area_b = edge(A0, A1, A2)
    denom_b = jnp.where(jnp.abs(area_b) < 1e-9, 1.0, area_b)
    bb0 = edge(A1, A2, pp) / denom_b
    bb1 = edge(A2, A0, pp) / denom_b
    bb2 = edge(A0, A1, pp) / denom_b
    bary = jnp.stack([bb0, bb1, bb2], axis=-1)                   # (N,P,3)
    bary = jnp.where(hit[..., None], bary, 0.0).astype(jnp.float32)
    return pix_to_face, bary


# ----------------------------------------------------------------------------
# Module
# ----------------------------------------------------------------------------
class MeshInterpolateModuleVoGE:
    """JAX/Pallas re-implementation of MeshInterpolateModuleVoGE.forward
    (default path: post_process=None, off_set_mesh=False).  The per-vertex
    memory bank is gathered onto faces and interpolated per pixel with the
    rasterizer's weights; the memory is NOT replicated per camera (the PyTorch
    `memory.repeat(N, 1)` is redundant data and is dropped for performance)."""

    def __init__(self, vertices, faces, memory_bank, image_size=(16, 16),
                 focal=3.0):
        # vertices: list of (V,3); faces: list of (F,3) int; memory_bank: list of (V,C)
        # TODO(synk): GaussianMesh / naive_vertices_converter (VoGE mesh-to-Gaussian
        # conversion) is external; the triangle mesh is used directly.
        self.verts_list = [jnp.asarray(v, jnp.float32) for v in vertices]
        self.faces_list = [jnp.asarray(f, jnp.int32) for f in faces]
        self.image_size = image_size
        self.focal = focal
        self.face_memory = None
        self.update_memory(memory_bank)

    def update_memory(self, memory_bank, faces=None):
        faces = self.faces_list if faces is None else faces
        # vertex_memory_to_face_memory: gather per-vertex features to faces -> (F,3,C)
        self.face_memory = [jnp.asarray(m, jnp.float32)[f]
                            for m, f in zip(memory_bank, faces)]

    def forward(self, campos, theta, deform_verts=None, **kwargs):
        # TODO(synk): off_set_mesh / deform_verts and post_process hooks are not
        # exercised here (default path).
        face_memory = jnp.concatenate(self.face_memory, axis=0)     # (F,3,C)
        R, T = campos_to_R_T(campos, theta)
        n_cam = campos.shape[0]

        verts = self.verts_list[0]
        faces = self.faces_list[0]

        # Pallas kernel 1: camera transform of vertices (lane-dense).
        verts_view = transform_verts(verts, R, T)                   # (N,V,3)

        # External rasterizer (plain-JAX stand-in), per-camera-local face ids.
        H, W = self.image_size
        pix_to_face, bary = simple_rasterizer(verts_view, faces, H, W,
                                              self.focal)

        # Pallas kernel 2: weighted face-feature interpolation (hot path).
        out = interpolate_face_attributes_pallas(pix_to_face, bary, face_memory)

        # (N, C, P) -> (N, C, H, W): a free reshape (no transpose pass).
        C = out.shape[1]
        return out.reshape(n_cam, C, H, W)

    __call__ = forward


# pure-JAX reference for the Pallas hot path (correctness check only)
def _interp_reference(pix_to_face, bary, face_memory):
    idx = jnp.maximum(pix_to_face, 0)
    gathered = face_memory[idx]                      # (N,P,3,C)
    out = (gathered * bary[..., None]).sum(axis=2)
    return jnp.where((pix_to_face >= 0)[..., None], out, 0.0)       # (N,P,C)


if __name__ == "__main__":
    key = jax.random.PRNGKey(0)
    kv, kf, km, kc, kt = jax.random.split(key, 5)

    V, F, C = 40, 200, 64
    N_CAM = 2
    H = W = 16

    verts = jax.random.uniform(kv, (V, 3), jnp.float32, -0.5, 0.5)
    faces = jax.random.randint(kf, (F, 3), 0, V, jnp.int32)
    mem = jax.random.normal(km, (V, C), jnp.float32)
    mem = mem / jnp.linalg.norm(mem, axis=-1, keepdims=True)

    module = MeshInterpolateModuleVoGE([verts], [faces], [mem],
                                       image_size=(H, W), focal=3.0)

    cam_dir = _normalize(jax.random.normal(kc, (N_CAM, 3), jnp.float32))
    campos = 3.0 * cam_dir
    theta = 0.3 * jax.random.normal(kt, (N_CAM,), jnp.float32)

    out = module(campos, theta)
    out = jax.block_until_ready(out)
    assert out.shape == (N_CAM, C, H, W), out.shape

    # verify Pallas kernel 1 against a pure-JAX reference
    R, T = campos_to_R_T(campos, theta)
    vv = transform_verts(verts, R, T)
    vv_ref = jnp.einsum('vk,nkj->nvj', verts, R) + T[:, None, :]
    assert jnp.allclose(vv, vv_ref, atol=1e-5, rtol=1e-5), float(
        jnp.max(jnp.abs(vv - vv_ref)))

    # verify Pallas kernel 2 (all code paths) against pure-JAX references
    face_memory = jnp.concatenate(module.face_memory, 0)            # (F,3,C)
    p2f, bary = simple_rasterizer(vv, faces, H, W, 3.0)
    fm_bf = face_memory.astype(jnp.bfloat16).astype(jnp.float32)
    ref_bf = _interp_reference(p2f, bary, fm_bf).transpose(0, 2, 1)
    ref_f32 = _interp_reference(p2f, bary, face_memory).transpose(0, 2, 1)

    # resident, single-chunk specialization (default tiling)
    got = interpolate_face_attributes_pallas(p2f, bary, face_memory)
    assert jnp.allclose(got, ref_bf, atol=1e-4), float(
        jnp.max(jnp.abs(got - ref_bf)))
    assert jnp.allclose(got, ref_f32, atol=5e-3, rtol=5e-3)

    # resident, multi-chunk path (fori_loop + chunk-range skipping)
    got_multi = interpolate_face_attributes_pallas(p2f, bary, face_memory,
                                                   tile_nf=128)
    assert jnp.allclose(got_multi, ref_bf, atol=1e-4), float(
        jnp.max(jnp.abs(got_multi - ref_bf)))

    # streaming fallback (k grid axis + pl.when chunk gating)
    got_stream = interpolate_face_attributes_pallas(p2f, bary, face_memory,
                                                    tile_nf=128,
                                                    force_stream=True)
    assert jnp.allclose(got_stream, ref_bf, atol=1e-4), float(
        jnp.max(jnp.abs(got_stream - ref_bf)))

    print("KERNEL_OK")
</pallas_src>

<mosaic_0001>
module attributes {stable_mosaic.version = 11 : i64} {
  func.func @_transform_verts_kernel(%arg0: i32, %arg1: memref<3x128xf32, #tpu.memory_space<vmem>>, %arg2: memref<1x3x3xf32, #tpu.memory_space<vmem>>, %arg3: memref<1x3x1xf32, #tpu.memory_space<vmem>>, %arg4: memref<1x3x128xf32, #tpu.memory_space<vmem>>) attributes {dimension_semantics = [#tpu.dimension_semantics<parallel>], iteration_bounds = array<i64: 2>, scalar_prefetch = 0 : i64, scratch_operands = 0 : i64, tpu.core_type = #tpu.core_type<tc>, window_params = [{pipeline_mode = #tpu.pipeline_mode<synchronous>, transform_indices = @transform_0, window_bounds = array<i64: 3, 128>}, {transform_indices = @transform_1, window_bounds = array<i64: 1, 3, 3>}, {transform_indices = @transform_2, window_bounds = array<i64: 1, 3, 1>}, {transform_indices = @transform_3, window_bounds = array<i64: 1, 3, 128>}]} {
    %c0 = arith.constant 0 : index
    %c0_0 = arith.constant 0 : index
    %0 = vector.load %arg1[%c0, %c0_0] : memref<3x128xf32, #tpu.memory_space<vmem>>, vector<3x128xf32>
    %c0_1 = arith.constant 0 : index
    %c0_2 = arith.constant 0 : index
    %c0_3 = arith.constant 0 : index
    %1 = vector.load %arg2[%c0_1, %c0_2, %c0_3] : memref<1x3x3xf32, #tpu.memory_space<vmem>>, vector<1x3x3xf32>
    %2 = vector.shape_cast %1 : vector<1x3x3xf32> to vector<3x3xf32>
    %c0_4 = arith.constant 0 : index
    %c0_5 = arith.constant 0 : index
    %c0_6 = arith.constant 0 : index
    %3 = vector.load %arg3[%c0_4, %c0_5, %c0_6] : memref<1x3x1xf32, #tpu.memory_space<vmem>>, vector<1x3x1xf32>
    %4 = vector.shape_cast %3 : vector<1x3x1xf32> to vector<3x1xf32>
    %5 = vector.extract_strided_slice %0 {offsets = [0, 0], sizes = [1, 128], strides = [1, 1]} : vector<3x128xf32> to vector<1x128xf32>
    %6 = vector.extract_strided_slice %2 {offsets = [0, 0], sizes = [1, 1], strides = [1, 1]} : vector<3x3xf32> to vector<1x1xf32>
    %7 = vector.broadcast %6 : vector<1x1xf32> to vector<1x128xf32>
    %8 = arith.mulf %5, %7 : vector<1x128xf32>
    %9 = vector.extract_strided_slice %0 {offsets = [1, 0], sizes = [1, 128], strides = [1, 1]} : vector<3x128xf32> to vector<1x128xf32>
    %10 = vector.extract_strided_slice %2 {offsets = [1, 0], sizes = [1, 1], strides = [1, 1]} : vector<3x3xf32> to vector<1x1xf32>
    %11 = vector.broadcast %10 : vector<1x1xf32> to vector<1x128xf32>
    %12 = arith.mulf %9, %11 : vector<1x128xf32>
    %13 = arith.addf %8, %12 : vector<1x128xf32>
    %14 = vector.extract_strided_slice %0 {offsets = [2, 0], sizes = [1, 128], strides = [1, 1]} : vector<3x128xf32> to vector<1x128xf32>
    %15 = vector.extract_strided_slice %2 {offsets = [2, 0], sizes = [1, 1], strides = [1, 1]} : vector<3x3xf32> to vector<1x1xf32>
    %16 = vector.broadcast %15 : vector<1x1xf32> to vector<1x128xf32>
    %17 = arith.mulf %14, %16 : vector<1x128xf32>
    %18 = arith.addf %13, %17 : vector<1x128xf32>
    %19 = vector.extract_strided_slice %4 {offsets = [0, 0], sizes = [1, 1], strides = [1, 1]} : vector<3x1xf32> to vector<1x1xf32>
    %20 = vector.broadcast %19 : vector<1x1xf32> to vector<1x128xf32>
    %21 = arith.addf %18, %20 : vector<1x128xf32>
    %22 = vector.extract_strided_slice %0 {offsets = [0, 0], sizes = [1, 128], strides = [1, 1]} : vector<3x128xf32> to vector<1x128xf32>
    %23 = vector.extract_strided_slice %2 {offsets = [0, 1], sizes = [1, 1], strides = [1, 1]} : vector<3x3xf32> to vector<1x1xf32>
    %24 = vector.broadcast %23 : vector<1x1xf32> to vector<1x128xf32>
    %25 = arith.mulf %22, %24 : vector<1x128xf32>
    %26 = vector.extract_strided_slice %0 {offsets = [1, 0], sizes = [1, 128], strides = [1, 1]} : vector<3x128xf32> to vector<1x128xf32>
    %27 = vector.extract_strided_slice %2 {offsets = [1, 1], sizes = [1, 1], strides = [1, 1]} : vector<3x3xf32> to vector<1x1xf32>
    %28 = vector.broadcast %27 : vector<1x1xf32> to vector<1x128xf32>
    %29 = arith.mulf %26, %28 : vector<1x128xf32>
    %30 = arith.addf %25, %29 : vector<1x128xf32>
    %31 = vector.extract_strided_slice %0 {offsets = [2, 0], sizes = [1, 128], strides = [1, 1]} : vector<3x128xf32> to vector<1x128xf32>
    %32 = vector.extract_strided_slice %2 {offsets = [2, 1], sizes = [1, 1], strides = [1, 1]} : vector<3x3xf32> to vector<1x1xf32>
    %33 = vector.broadcast %32 : vector<1x1xf32> to vector<1x128xf32>
    %34 = arith.mulf %31, %33 : vector<1x128xf32>
    %35 = arith.addf %30, %34 : vector<1x128xf32>
    %36 = vector.extract_strided_slice %4 {offsets = [1, 0], sizes = [1, 1], strides = [1, 1]} : vector<3x1xf32> to vector<1x1xf32>
    %37 = vector.broadcast %36 : vector<1x1xf32> to vector<1x128xf32>
    %38 = arith.addf %35, %37 : vector<1x128xf32>
    %39 = vector.extract_strided_slice %0 {offsets = [0, 0], sizes = [1, 128], strides = [1, 1]} : vector<3x128xf32> to vector<1x128xf32>
    %40 = vector.extract_strided_slice %2 {offsets = [0, 2], sizes = [1, 1], strides = [1, 1]} : vector<3x3xf32> to vector<1x1xf32>
    %41 = vector.broadcast %40 : vector<1x1xf32> to vector<1x128xf32>
    %42 = arith.mulf %39, %41 : vector<1x128xf32>
    %43 = vector.extract_strided_slice %0 {offsets = [1, 0], sizes = [1, 128], strides = [1, 1]} : vector<3x128xf32> to vector<1x128xf32>
    %44 = vector.extract_strided_slice %2 {offsets = [1, 2], sizes = [1, 1], strides = [1, 1]} : vector<3x3xf32> to vector<1x1xf32>
    %45 = vector.broadcast %44 : vector<1x1xf32> to vector<1x128xf32>
    %46 = arith.mulf %43, %45 : vector<1x128xf32>
    %47 = arith.addf %42, %46 : vector<1x128xf32>
    %48 = vector.extract_strided_slice %0 {offsets = [2, 0], sizes = [1, 128], strides = [1, 1]} : vector<3x128xf32> to vector<1x128xf32>
    %49 = vector.extract_strided_slice %2 {offsets = [2, 2], sizes = [1, 1], strides = [1, 1]} : vector<3x3xf32> to vector<1x1xf32>
    %50 = vector.broadcast %49 : vector<1x1xf32> to vector<1x128xf32>
    %51 = arith.mulf %48, %50 : vector<1x128xf32>
    %52 = arith.addf %47, %51 : vector<1x128xf32>
    %53 = vector.extract_strided_slice %4 {offsets = [2, 0], sizes = [1, 1], strides = [1, 1]} : vector<3x1xf32> to vector<1x1xf32>
    %54 = vector.broadcast %53 : vector<1x1xf32> to vector<1x128xf32>
    %55 = arith.addf %52, %54 : vector<1x128xf32>
    %56 = tpu.concatenate %21, %38, %55 in 0 : vector<1x128xf32>, vector<1x128xf32>, vector<1x128xf32> -> vector<3x128xf32>
    %c0_7 = arith.constant 0 : index
    %c0_8 = arith.constant 0 : index
    %c0_9 = arith.constant 0 : index
    %57 = vector.load %arg4[%c0_7, %c0_8, %c0_9] : memref<1x3x128xf32, #tpu.memory_space<vmem>>, vector<1x3x128xf32>
    %58 = vector.shape_cast %57 : vector<1x3x128xf32> to vector<3x128xf32>
    %59 = vector.shape_cast %56 : vector<3x128xf32> to vector<1x3x128xf32>
    tpu.vector_store %arg4[%c0_7, %c0_8, %c0_9], %59 {strides = array<i32>} : memref<1x3x128xf32, #tpu.memory_space<vmem>>, vector<1x3x128xf32>,
    return
  }
  func.func @transform_0(%arg0: i32) -> (i32, i32) {
    %c0_i32 = arith.constant 0 : i32
    %c0_i32_0 = arith.constant 0 : i32
    %c0_i32_1 = arith.constant 0 : i32
    return %c0_i32, %c0_i32_0 : i32, i32
  }
  func.func @transform_1(%arg0: i32) -> (i32, i32, i32) {
    %c0_i32 = arith.constant 0 : i32
    %c0_i32_0 = arith.constant 0 : i32
    %c0_i32_1 = arith.constant 0 : i32
    return %arg0, %c0_i32, %c0_i32_0 : i32, i32, i32
  }
  func.func @transform_2(%arg0: i32) -> (i32, i32, i32) {
    %c0_i32 = arith.constant 0 : i32
    %c0_i32_0 = arith.constant 0 : i32
    %c0_i32_1 = arith.constant 0 : i32
    return %arg0, %c0_i32, %c0_i32_0 : i32, i32, i32
  }
  func.func @transform_3(%arg0: i32) -> (i32, i32, i32) {
    %c0_i32 = arith.constant 0 : i32
    %c0_i32_0 = arith.constant 0 : i32
    %c0_i32_1 = arith.constant 0 : i32
    return %arg0, %c0_i32, %c0_i32_0 : i32, i32, i32
  }
}

</mosaic_0001>

<llo_original>
// kernel: tpu_custom_call.1
$region0: #{tpu_custom_call.1}
  #allocation0 [shape = 'u32[]', space=smem, size = 0x4, offset = 0x4, fixed_abs, tag = 'smem constant byte address 0x4 - core index']
  #allocation1 [shape = 'u32[72,128]{1,0:T(1,128)}', space=vmem, size = 0x9000, scoped, tag = 'internal scratch']
  %s0 = inlined_call_operand.vmem [shape: f32[3,128], index: 0, kind: input, shape index: {}]
  %s1 = inlined_call_operand.vmem [shape: f32[2,3,3], index: 1, kind: input, shape index: {}]
  %s2 = inlined_call_operand.vmem [shape: f32[2,3,1], index: 2, kind: input, shape index: {}]
  %s3 = inlined_call_operand.vmem [shape: f32[2,3,128], index: 3, kind: output, shape index: {}]
  %s4 = sld [smem:[#allocation0]]
  $region45: #{tpu_custom_call.1} parent=0
    _
  %s6 = ssub.s32 1, %s4
  %s7 = scalar_select 0, %s6, %s4
  loop: start=0, step=1, limit=4
  $region2: #{tpu_custom_call.1} parent=0 // loop_pre_header
    _
  $region3: #{tpu_custom_call.1} parent=0 // loop_header
    %s9 = sphi 0, %s13
    %p10 = scmp.ge.s32.totalorder %s9, 4
    %s17 = sphi 0, %s17
    %s19 = sphi 0, %s17
    %s20 = sphi 0, %s19
    %s34 = sphi 0, %s20
    %s40 = sphi 0, %s42
    %s43 = sphi 0, %s40
    %s44 = sphi 0, %s43
    %s60 = sphi 0, %s44
    %s66 = sphi 0, %s68
    %s69 = sphi 0, %s66
    %s70 = sphi 0, %s69
    %s86 = sphi 0, %s70
    %s92 = sphi 0, %s94
    %s95 = sphi 0, %s92
    %s96 = sphi 0, %s95
    %s112 = sphi 0, %s96
  $region4: #{tpu_custom_call.1} parent=0 // loop_header_branch
    %12 = sbr.rel (%p10) target = $region8
  $region5: #{tpu_custom_call.1} parent=0 // loop_body
    %s14 = ssub.s32 %s9, 1
    %s15 = ssub.s32 %s9, 2
    %s16 = sadd.s32 %s9, 1
    %s18 = sadd.s32 %s17, 1
    %p21 = scmp.eq.s32.totalorder %s9, 1
    %p22 = scmp.ne.s32.totalorder %s17, %s19
    %p23 = scmp.eq.s32.totalorder %s9, 0
    %p24 = por %p22, %p23
    %p25 = scmp.ne.s32.totalorder %s17, %s19
    %p26 = scmp.eq.s32.totalorder %s14, 1
    %p27 = por %p25, %p26
    %p28 = scmp.ne.s32.totalorder %s19, %s20
    %p29 = scmp.eq.s32.totalorder %s14, 0
    %p30 = por %p28, %p29
    %p31 = scmp.ne.s32.totalorder %s19, %s20
    %p32 = scmp.eq.s32.totalorder %s15, 1
    %p33 = por %p31, %p32
    %p35 = scmp.ne.s32.totalorder %s20, %s34
    %p36 = scmp.eq.s32.totalorder %s15, 0
    %p37 = por %p35, %p36
    %s38 = ssub.s32 %s9, %s16
    %p39 = scmp.eq.s32.totalorder %s38, 0
    %s41 = sadd.s32 %s40, 1
    %s42 = scalar_select %p39, %s40, %s41
    %p45 = pneg %p39
    %p46 = scmp.eq.s32.totalorder %s9, 1
    %p47 = por %p45, %p46
    %p48 = scmp.ne.s32.totalorder %s40, %s43
    %p49 = scmp.eq.s32.totalorder %s9, 0
    %p50 = por %p48, %p49
    %p51 = scmp.ne.s32.totalorder %s40, %s43
    %p52 = scmp.eq.s32.totalorder %s14, 1
    %p53 = por %p51, %p52
    %p54 = scmp.ne.s32.totalorder %s43, %s44
    %p55 = scmp.eq.s32.totalorder %s14, 0
    %p56 = por %p54, %p55
    %p57 = scmp.ne.s32.totalorder %s43, %s44
    %p58 = scmp.eq.s32.totalorder %s15, 1
    %p59 = por %p57, %p58
    %p61 = scmp.ne.s32.totalorder %s44, %s60
    %p62 = scmp.eq.s32.totalorder %s15, 0
    %p63 = por %p61, %p62
    %s64 = ssub.s32 %s9, %s16
    %p65 = scmp.eq.s32.totalorder %s64, 0
    %s67 = sadd.s32 %s66, 1
    %s68 = scalar_select %p65, %s66, %s67
    %p71 = pneg %p65
    %p72 = scmp.eq.s32.totalorder %s9, 1
    %p73 = por %p71, %p72
    %p74 = scmp.ne.s32.totalorder %s66, %s69
    %p75 = scmp.eq.s32.totalorder %s9, 0
    %p76 = por %p74, %p75
    %p77 = scmp.ne.s32.totalorder %s66, %s69
    %p78 = scmp.eq.s32.totalorder %s14, 1
    %p79 = por %p77, %p78
    %p80 = scmp.ne.s32.totalorder %s69, %s70
    %p81 = scmp.eq.s32.totalorder %s14, 0
    %p82 = por %p80, %p81
    %p83 = scmp.ne.s32.totalorder %s69, %s70
    %p84 = scmp.eq.s32.totalorder %s15, 1
    %p85 = por %p83, %p84
    %p87 = scmp.ne.s32.totalorder %s70, %s86
    %p88 = scmp.eq.s32.totalorder %s15, 0
    %p89 = por %p87, %p88
    %s90 = ssub.s32 %s9, %s16
    %p91 = scmp.eq.s32.totalorder %s90, 0
    %s93 = sadd.s32 %s92, 1
    %s94 = scalar_select %p91, %s92, %s93
    %p97 = pneg %p91
    %p98 = scmp.eq.s32.totalorder %s9, 1
    %p99 = por %p97, %p98
    %p100 = scmp.ne.s32.totalorder %s92, %s95
    %p101 = scmp.eq.s32.totalorder %s9, 0
    %p102 = por %p100, %p101
    %p103 = scmp.ne.s32.totalorder %s92, %s95
    %p104 = scmp.eq.s32.totalorder %s14, 1
    %p105 = por %p103, %p104
    %p106 = scmp.ne.s32.totalorder %s95, %s96
    %p107 = scmp.eq.s32.totalorder %s14, 0
    %p108 = por %p106, %p107
    %p109 = scmp.ne.s32.totalorder %s95, %s96
    %p110 = scmp.eq.s32.totalorder %s15, 1
    %p111 = por %p109, %p110
    %p113 = scmp.ne.s32.totalorder %s96, %s112
    %p114 = scmp.eq.s32.totalorder %s15, 0
    %p115 = por %p113, %p114
    %p116 = scmp.le.s32.totalorder 1, %s9
    %p117 = scmp.lt.s32.totalorder %s9, 3
    %p118 = pnand %p116, %p117
    %p119 = pneg %p118
    // Predicated region
    $region9: #{tpu_custom_call.1} parent=5 // pred_check
      _
    $region10: #{tpu_custom_call.1} parent=5 // pred_check_branch
      %121 = sbr.rel (%p118) target = $region12
    $region11: #{tpu_custom_call.1} parent=5 // pred_region
      %s122 = ssub.s32 %s9, 1
      // Predicated region
      $region13: #{tpu_custom_call.1} parent=11 // pred_check
        %p123 = pneg %p30
      $region14: #{tpu_custom_call.1} parent=11 // pred_check_branch
        %125 = sbr.rel (%p123) target = $region16
      $region15: #{tpu_custom_call.1} parent=11 // pred_region
        _
      $region16: #{tpu_custom_call.1} parent=11 // pred_fallthru
        _
    $region12: #{tpu_custom_call.1} parent=5 // pred_fallthru
      _
    %p126 = scmp.lt.s32.totalorder %s9, 2
    // Predicated region
    $region17: #{tpu_custom_call.1} parent=5 // pred_check
      %p127 = pneg %p126
    $region18: #{tpu_custom_call.1} parent=5 // pred_check_branch
      %129 = sbr.rel (%p127) target = $region20
    $region19: #{tpu_custom_call.1} parent=5 // pred_region
      // Predicated region
      $region21: #{tpu_custom_call.1} parent=19 // pred_check
        %p130 = pneg %p50
      $region22: #{tpu_custom_call.1} parent=19 // pred_check_branch
        %132 = sbr.rel (%p130) target = $region24
      $region23: #{tpu_custom_call.1} parent=19 // pred_region
        %p133 = scmp.lt.s32.totalorder %s9, 1
        %s134 = scalar_select %p133, %s9, 1
        %s135 = smul.addr %s134, 4
        %s136 = scalar_lea.vmem %s1, %s135
      $region24: #{tpu_custom_call.1} parent=19 // pred_fallthru
        _
      // Predicated region
      $region25: #{tpu_custom_call.1} parent=19 // pred_check
        %p137 = pneg %p76
      $region26: #{tpu_custom_call.1} parent=19 // pred_check_branch
        %139 = sbr.rel (%p137) target = $region28
      $region27: #{tpu_custom_call.1} parent=19 // pred_region
        %p140 = scmp.lt.s32.totalorder %s9, 1
        %s141 = scalar_select %p140, %s9, 1
        %s142 = smul.addr %s141, 4
        %s143 = scalar_lea.vmem %s2, %s142
      $region28: #{tpu_custom_call.1} parent=19 // pred_fallthru
        _
    $region20: #{tpu_custom_call.1} parent=5 // pred_fallthru
      _
    %p144 = scmp.le.s32.totalorder 1, %s9
    %p145 = scmp.lt.s32.totalorder %s9, 3
    %p146 = pnand %p144, %p145
    %p147 = pneg %p146
    // Predicated region
    $region29: #{tpu_custom_call.1} parent=5 // pred_check
      _
    $region30: #{tpu_custom_call.1} parent=5 // pred_check_branch
      %149 = sbr.rel (%p146) target = $region32
    $region31: #{tpu_custom_call.1} parent=5 // pred_region
      %s150 = ssub.s32 %s9, 1
      %p151 = pneg %p30
      %p152 = pneg %p27
      %p153 = scmp.lt.s32.totalorder %s14, 1
      %s154 = scalar_select %p153, %s14, 1
      %s155 = smul.addr %s154, 4
      %s156 = scalar_lea.vmem %s1, %s155
      %p157 = pneg %p56
      %p158 = pneg %p53
      %p159 = scmp.lt.s32.totalorder %s14, 1
      %s160 = scalar_select %p159, %s14, 1
      %s161 = smul.addr %s160, 4
      %s162 = scalar_lea.vmem %s2, %s161
      %p163 = pneg %p82
      %p164 = pneg %p79
      %p165 = pneg %p108
      %p166 = pneg %p105
      %p167 = scmp.lt.s32.totalorder %s14, 1
      %s168 = scalar_select %p167, %s14, 1
      %s169 = smul.addr %s168, 4
      %s170 = scalar_lea.vmem %s3, %s169
      %p171 = scmp.lt.s32.totalorder %s14, 1
      %s172 = scalar_select %p171, %s14, 1
      %s173 = smul.addr %s172, 4
      %s174 = scalar_lea.vmem %s1, %s173
      %p175 = scmp.lt.s32.totalorder %s14, 1
      %s176 = scalar_select %p175, %s14, 1
      %s177 = smul.addr %s176, 4
      %s178 = scalar_lea.vmem %s2, %s177
      %p179 = scmp.lt.s32.totalorder %s14, 1
      %s180 = scalar_select %p179, %s14, 1
      %s181 = smul.addr %s180, 4
      %s182 = scalar_lea.vmem %s3, %s181
      %v183 = vld [vmem:[%s0] sm:$0x7]
      %v184 = vld [vmem:[%s174] sm:$0x7]
      %v185 = vld [vmem:[%s178] sm:$0x7]
      %187 = vset.pattern.permute.xlu0 0
      %188 = vperm.xlu0 %187, %v184
      %v189 = vpop.permute.xlu0 %188
      %v191 = vmul.f32 %v183, %v189
      %v193 = vrot.slane %v191, 1
      %v195 = vadd.f32 %v191, %v193
      %v196 = vrot.slane %v191, 2
      %v198 = vadd.f32 %v195, %v196
      %200 = vset.pattern.permute.xlu0 0
      %201 = vperm.xlu0 %200, %v185
      %v202 = vpop.permute.xlu0 %201
      %v204 = vadd.f32 %v198, %v202
      %205 = vset.pattern.permute.xlu0 1
      %206 = vperm.xlu0 %205, %v184
      %v207 = vpop.permute.xlu0 %206
      %v209 = vmul.f32 %v183, %v207
      %v211 = vrot.slane %v209, 1
      %v213 = vadd.f32 %v209, %v211
      %v214 = vrot.slane %v209, 2
      %v216 = vadd.f32 %v213, %v214
      %v217 = vrot.slane %v202, 1
      %v219 = vadd.f32 %v216, %v217
      %220 = vset.pattern.permute.xlu0 2
      %221 = vperm.xlu0 %220, %v184
      %v222 = vpop.permute.xlu0 %221
      %v224 = vmul.f32 %v183, %v222
      %v226 = vrot.slane %v224, 1
      %v228 = vadd.f32 %v224, %v226
      %v229 = vrot.slane %v224, 2
      %v231 = vadd.f32 %v228, %v229
      %v232 = vrot.slane %v202, 2
      %v234 = vadd.f32 %v231, %v232
      %v236 = vrot.slane %v219, 7
      %v239 = vrot.slane %v234, 6
      %vm241 = vcmask 1040384
      %v242 = vsel %vm241, %v204, %v236
      %vm243 = vcmask 1041408
      %v244 = vsel %vm243, %v242, %v239
      %245 = vst [vmem:[%s182] sm:$0x7] %v244
      %p246 = scmp.lt.s32.totalorder %s14, 1
      %s247 = scalar_select %p246, %s14, 1
      %s248 = smul.addr %s247, 4
      %s249 = scalar_lea.vmem %s3, %s248
      // Predicated region
      $region33: #{tpu_custom_call.1} parent=31 // pred_check
        %p250 = pneg %p105
      $region34: #{tpu_custom_call.1} parent=31 // pred_check_branch
        %252 = sbr.rel (%p250) target = $region36
      $region35: #{tpu_custom_call.1} parent=31 // pred_region
        _
      $region36: #{tpu_custom_call.1} parent=31 // pred_fallthru
        _
    $region32: #{tpu_custom_call.1} parent=5 // pred_fallthru
      _
    %p253 = scmp.le.s32.totalorder 2, %s9
    // Predicated region
    $region37: #{tpu_custom_call.1} parent=5 // pred_check
      %p254 = pneg %p253
    $region38: #{tpu_custom_call.1} parent=5 // pred_check_branch
      %256 = sbr.rel (%p254) target = $region40
    $region39: #{tpu_custom_call.1} parent=5 // pred_region
      %s257 = ssub.s32 %s9, 2
      // Predicated region
      $region41: #{tpu_custom_call.1} parent=39 // pred_check
        %p258 = pneg %p111
      $region42: #{tpu_custom_call.1} parent=39 // pred_check_branch
        %260 = sbr.rel (%p258) target = $region44
      $region43: #{tpu_custom_call.1} parent=39 // pred_region
        %p261 = scmp.lt.s32.totalorder %s15, 1
        %s262 = scalar_select %p261, %s15, 1
        %s263 = smul.addr %s262, 4
        %s264 = scalar_lea.vmem %s3, %s263
      $region44: #{tpu_custom_call.1} parent=39 // pred_fallthru
        _
    $region40: #{tpu_custom_call.1} parent=5 // pred_fallthru
      _
  $region6: #{tpu_custom_call.1} parent=0 // loop_footer
    %s13 = sadd.s32 1, %s9
  $region7: #{tpu_custom_call.1} parent=0 // loop_footer_branch
    %8 = sbr.rel target = $region3
  $region8: #{tpu_custom_call.1} parent=0 // loop_exit
    _

</llo_original>
